<compile_context>
chip_gen: v7x
topology: tpu7x:2x2x1
jax: 0.10.0
libtpu: 0.0.40
codegen_flags: <defaults>
</compile_context>

<pallas_src>
import functools

import jax
import jax.numpy as jnp
from jax import lax
from jax.experimental import pallas as pl
from jax.experimental.pallas import tpu as pltpu

LANE = 128                  # vreg lane width
SUBLANE_ALIGN = 32          # row alignment (covers f32 / bf16 / int8 packing)
TARGET_BLOCK_ROWS = 2048    # ~1 MiB f32 per input tile


def _l1_sums_kernel(g1_ref, p1_ref, g2_ref, p2_ref, c1_ref, c2_ref,
                    out_ref, acc_ref, *, block_rows, valid_rows, needs_mask):
    """Accumulates sum(|a-b|) for the three pairs.

    acc_ref : VMEM (3, 8, LANE) f32 running vector accumulators.
    out_ref : SMEM (3,) f32 final scalar sums (written on the last step only).
    """
    i = pl.program_id(0)

    @pl.when(i == 0)
    def _init():
        acc_ref[...] = jnp.zeros_like(acc_ref)

    if needs_mask:
        # Only rows < valid_rows belong to the real slab; rows beyond it in
        # the (partial) last Pallas block contain unspecified data.
        row_ids = i * block_rows + lax.broadcasted_iota(
            jnp.int32, (block_rows, 1), 0)
        mask = row_ids < valid_rows
    else:
        mask = None

    def fold_abs_diff(a_ref, b_ref):
        d = jnp.abs(a_ref[...].astype(jnp.float32)
                    - b_ref[...].astype(jnp.float32))
        if mask is not None:
            d = jnp.where(mask, d, 0.0)
        # Fold rows into an (8, LANE) tile: pure VPU adds, no XLU per step.
        return d.reshape(block_rows // 8, 8, LANE).sum(axis=0)

    acc_ref[0] += fold_abs_diff(g1_ref, p1_ref)
    acc_ref[1] += fold_abs_diff(g2_ref, p2_ref)
    acc_ref[2] += fold_abs_diff(c1_ref, c2_ref)

    @pl.when(i == pl.num_programs(0) - 1)
    def _finalize():
        out_ref[0] = jnp.sum(acc_ref[0])
        out_ref[1] = jnp.sum(acc_ref[1])
        out_ref[2] = jnp.sum(acc_ref[2])


@jax.jit
def multimodal_loss(modality_gt1, modality_gt2,
                    modality_predict1, modality_predict2,
                    com_img_w1, com_img_w2):
    pairs = ((modality_gt1, modality_predict1),
             (modality_gt2, modality_predict2),
             (com_img_w1, com_img_w2))

    counts = []
    flats = []
    for a, b in pairs:
        assert a.size == b.size, "L1Loss pair members must match in size"
        counts.append(a.size)
        flats.append(jnp.ravel(a))
        flats.append(jnp.ravel(b))

    # Common slab geometry for all six tensors.  Zero padding is identical
    # within a pair, so it contributes exactly 0 to sum(|a-b|); the mean
    # divides by the true element count below.
    rows = max(pl.cdiv(n, LANE) for n in counts)
    rows = pl.cdiv(rows, SUBLANE_ALIGN) * SUBLANE_ALIGN
    padded = rows * LANE
    slabs = []
    for f in flats:
        if f.shape[0] != padded:            # skip the HBM copy when aligned
            f = jnp.pad(f, (0, padded - f.shape[0]))
        slabs.append(f.reshape(rows, LANE))

    block_rows = min(TARGET_BLOCK_ROWS, rows)   # multiple of SUBLANE_ALIGN
    grid_steps = pl.cdiv(rows, block_rows)
    needs_mask = (rows % block_rows) != 0

    kernel = functools.partial(_l1_sums_kernel,
                               block_rows=block_rows,
                               valid_rows=rows,
                               needs_mask=needs_mask)

    tile_spec = pl.BlockSpec((block_rows, LANE), lambda i: (i, 0))

    in_bytes = sum(int(s.size) * s.dtype.itemsize for s in slabs)
    cost = pl.CostEstimate(flops=3 * int(sum(counts)),    # sub + abs + add
                           transcendentals=0,
                           bytes_accessed=in_bytes + 3 * 4)

    sums = pl.pallas_call(
        kernel,
        out_shape=jax.ShapeDtypeStruct((3,), jnp.float32),
        grid_spec=pltpu.PrefetchScalarGridSpec(
            num_scalar_prefetch=0,
            grid=(grid_steps,),
            in_specs=[tile_spec] * 6,
            out_specs=pl.BlockSpec(memory_space=pltpu.SMEM),
            scratch_shapes=[pltpu.VMEM((3, 8, LANE), jnp.float32)]),
        compiler_params=pltpu.CompilerParams(
            # Single carried-accumulator reduction axis.
            # TODO(synk): on v7x, split this axis into a leading "parallel"
            # axis of size 2 (one half per TensorCore) with per-core partial
            # sums combined in the wrapper, to use both TCs' HBM bandwidth.
            dimension_semantics=("arbitrary",),
            vmem_limit_bytes=32 * 1024 * 1024),
        cost_estimate=cost,
    )(*slabs)

    l1 = sums[0] / jnp.float32(counts[0])
    l2 = sums[1] / jnp.float32(counts[1])
    l3 = sums[2] / jnp.float32(counts[2])

    return {
        "self_supervised_modality1": l1,
        "self_supervised_modality2": l2,
        "self_supervised_common": l3,
        "total_loss": l1 + l2 + l3,
    }


def _check(shape, seed):
    ks = jax.random.split(jax.random.PRNGKey(seed), 6)
    gt1 = jax.random.normal(ks[0], shape, dtype=jnp.float32)
    gt2 = jax.random.normal(ks[1], shape, dtype=jnp.float32)
    pr1 = jax.random.normal(ks[2], shape, dtype=jnp.float32)
    pr2 = jax.random.normal(ks[3], shape, dtype=jnp.float32)
    cw1 = jax.random.normal(ks[4], shape, dtype=jnp.float32)
    cw2 = jax.random.normal(ks[5], shape, dtype=jnp.float32)

    losses = multimodal_loss(gt1, gt2, pr1, pr2, cw1, cw2)
    jax.block_until_ready(losses)

    ref1 = jnp.mean(jnp.abs(gt1 - pr1))
    ref2 = jnp.mean(jnp.abs(gt2 - pr2))
    ref3 = jnp.mean(jnp.abs(cw1 - cw2))
    assert jnp.allclose(losses["self_supervised_modality1"], ref1, atol=1e-5)
    assert jnp.allclose(losses["self_supervised_modality2"], ref2, atol=1e-5)
    assert jnp.allclose(losses["self_supervised_common"], ref3, atol=1e-5)
    assert jnp.allclose(losses["total_loss"], ref1 + ref2 + ref3, atol=1e-5)


if __name__ == "__main__":
    # Small shape matching the module's NCHW usage (single grid step).
    _check((2, 4, 16, 16), seed=0)
    # Slightly larger shape exercising the multi-step + masked-tail path.
    _check((4, 8, 100, 100), seed=1)
    print("KERNEL_OK")
</pallas_src>

<mosaic_0001>
module attributes {stable_mosaic.version = 11 : i64} {
  func.func @_l1_sums_kernel(%arg0: i32, %arg1: memref<32x128xf32, #tpu.memory_space<vmem>>, %arg2: memref<32x128xf32, #tpu.memory_space<vmem>>, %arg3: memref<32x128xf32, #tpu.memory_space<vmem>>, %arg4: memref<32x128xf32, #tpu.memory_space<vmem>>, %arg5: memref<32x128xf32, #tpu.memory_space<vmem>>, %arg6: memref<32x128xf32, #tpu.memory_space<vmem>>, %arg7: memref<3xf32, #tpu.memory_space<smem>>, %arg8: memref<3x8x128xf32, #tpu.memory_space<vmem>>) attributes {dimension_semantics = [#tpu.dimension_semantics<arbitrary>], iteration_bounds = array<i64: 1>, scalar_prefetch = 0 : i64, scratch_operands = 1 : i64, tpu.core_type = #tpu.core_type<tc>, window_params = [{transform_indices = @transform_0, window_bounds = array<i64: 32, 128>}, {transform_indices = @transform_1, window_bounds = array<i64: 32, 128>}, {transform_indices = @transform_2, window_bounds = array<i64: 32, 128>}, {transform_indices = @transform_3, window_bounds = array<i64: 32, 128>}, {transform_indices = @transform_4, window_bounds = array<i64: 32, 128>}, {transform_indices = @transform_5, window_bounds = array<i64: 32, 128>}, {transform_indices = @transform_6, window_bounds = array<i64: 3>}]} {
    %c0_i32 = arith.constant 0 : i32
    %0 = arith.cmpi eq, %arg0, %c0_i32 : i32
    %1 = arith.extui %0 : i1 to i32
    %c0_i32_0 = arith.constant 0 : i32
    %2 = arith.cmpi ne, %1, %c0_i32_0 : i32
    scf.if %2 {
      %cst_32 = arith.constant 0.000000e+00 : f32
      %42 = vector.broadcast %cst_32 : f32 to vector<3x8x128xf32>
      %c0_33 = arith.constant 0 : index
      %c0_34 = arith.constant 0 : index
      %c0_35 = arith.constant 0 : index
      %43 = vector.load %arg8[%c0_33, %c0_34, %c0_35] : memref<3x8x128xf32, #tpu.memory_space<vmem>>, vector<3x8x128xf32>
      tpu.vector_store %arg8[%c0_33, %c0_34, %c0_35], %42 {strides = array<i32>} : memref<3x8x128xf32, #tpu.memory_space<vmem>>, vector<3x8x128xf32>,
    } else {
    }
    %c0 = arith.constant 0 : index
    %c0_1 = arith.constant 0 : index
    %c0_2 = arith.constant 0 : index
    %3 = vector.load %arg8[%c0, %c0_1, %c0_2] : memref<3x8x128xf32, #tpu.memory_space<vmem>>, vector<1x8x128xf32>
    %4 = vector.shape_cast %3 : vector<1x8x128xf32> to vector<8x128xf32>
    %c0_3 = arith.constant 0 : index
    %c0_4 = arith.constant 0 : index
    %5 = vector.load %arg1[%c0_3, %c0_4] : memref<32x128xf32, #tpu.memory_space<vmem>>, vector<32x128xf32>
    %c0_5 = arith.constant 0 : index
    %c0_6 = arith.constant 0 : index
    %6 = vector.load %arg2[%c0_5, %c0_6] : memref<32x128xf32, #tpu.memory_space<vmem>>, vector<32x128xf32>
    %7 = arith.subf %5, %6 : vector<32x128xf32>
    %8 = math.absf %7 : vector<32x128xf32>
    %9 = vector.shape_cast %8 : vector<32x128xf32> to vector<4x8x128xf32>
    %cst = arith.constant dense<0.000000e+00> : vector<8x128xf32>
    %10 = vector.multi_reduction <add>, %9, %cst [0] : vector<4x8x128xf32> to vector<8x128xf32>
    %11 = arith.addf %4, %10 : vector<8x128xf32>
    %c0_7 = arith.constant 0 : index
    %c0_8 = arith.constant 0 : index
    %c0_9 = arith.constant 0 : index
    %12 = vector.load %arg8[%c0_7, %c0_8, %c0_9] : memref<3x8x128xf32, #tpu.memory_space<vmem>>, vector<1x8x128xf32>
    %13 = vector.shape_cast %12 : vector<1x8x128xf32> to vector<8x128xf32>
    %14 = vector.shape_cast %11 : vector<8x128xf32> to vector<1x8x128xf32>
    tpu.vector_store %arg8[%c0_7, %c0_8, %c0_9], %14 {strides = array<i32>} : memref<3x8x128xf32, #tpu.memory_space<vmem>>, vector<1x8x128xf32>,
    %c1 = arith.constant 1 : index
    %c0_10 = arith.constant 0 : index
    %c0_11 = arith.constant 0 : index
    %15 = vector.load %arg8[%c1, %c0_10, %c0_11] : memref<3x8x128xf32, #tpu.memory_space<vmem>>, vector<1x8x128xf32>
    %16 = vector.shape_cast %15 : vector<1x8x128xf32> to vector<8x128xf32>
    %c0_12 = arith.constant 0 : index
    %c0_13 = arith.constant 0 : index
    %17 = vector.load %arg3[%c0_12, %c0_13] : memref<32x128xf32, #tpu.memory_space<vmem>>, vector<32x128xf32>
    %c0_14 = arith.constant 0 : index
    %c0_15 = arith.constant 0 : index
    %18 = vector.load %arg4[%c0_14, %c0_15] : memref<32x128xf32, #tpu.memory_space<vmem>>, vector<32x128xf32>
    %19 = arith.subf %17, %18 : vector<32x128xf32>
    %20 = math.absf %19 : vector<32x128xf32>
    %21 = vector.shape_cast %20 : vector<32x128xf32> to vector<4x8x128xf32>
    %cst_16 = arith.constant dense<0.000000e+00> : vector<8x128xf32>
    %22 = vector.multi_reduction <add>, %21, %cst_16 [0] : vector<4x8x128xf32> to vector<8x128xf32>
    %23 = arith.addf %16, %22 : vector<8x128xf32>
    %c1_17 = arith.constant 1 : index
    %c0_18 = arith.constant 0 : index
    %c0_19 = arith.constant 0 : index
    %24 = vector.load %arg8[%c1_17, %c0_18, %c0_19] : memref<3x8x128xf32, #tpu.memory_space<vmem>>, vector<1x8x128xf32>
    %25 = vector.shape_cast %24 : vector<1x8x128xf32> to vector<8x128xf32>
    %26 = vector.shape_cast %23 : vector<8x128xf32> to vector<1x8x128xf32>
    tpu.vector_store %arg8[%c1_17, %c0_18, %c0_19], %26 {strides = array<i32>} : memref<3x8x128xf32, #tpu.memory_space<vmem>>, vector<1x8x128xf32>,
    %c2 = arith.constant 2 : index
    %c0_20 = arith.constant 0 : index
    %c0_21 = arith.constant 0 : index
    %27 = vector.load %arg8[%c2, %c0_20, %c0_21] : memref<3x8x128xf32, #tpu.memory_space<vmem>>, vector<1x8x128xf32>
    %28 = vector.shape_cast %27 : vector<1x8x128xf32> to vector<8x128xf32>
    %c0_22 = arith.constant 0 : index
    %c0_23 = arith.constant 0 : index
    %29 = vector.load %arg5[%c0_22, %c0_23] : memref<32x128xf32, #tpu.memory_space<vmem>>, vector<32x128xf32>
    %c0_24 = arith.constant 0 : index
    %c0_25 = arith.constant 0 : index
    %30 = vector.load %arg6[%c0_24, %c0_25] : memref<32x128xf32, #tpu.memory_space<vmem>>, vector<32x128xf32>
    %31 = arith.subf %29, %30 : vector<32x128xf32>
    %32 = math.absf %31 : vector<32x128xf32>
    %33 = vector.shape_cast %32 : vector<32x128xf32> to vector<4x8x128xf32>
    %cst_26 = arith.constant dense<0.000000e+00> : vector<8x128xf32>
    %34 = vector.multi_reduction <add>, %33, %cst_26 [0] : vector<4x8x128xf32> to vector<8x128xf32>
    %35 = arith.addf %28, %34 : vector<8x128xf32>
    %c2_27 = arith.constant 2 : index
    %c0_28 = arith.constant 0 : index
    %c0_29 = arith.constant 0 : index
    %36 = vector.load %arg8[%c2_27, %c0_28, %c0_29] : memref<3x8x128xf32, #tpu.memory_space<vmem>>, vector<1x8x128xf32>
    %37 = vector.shape_cast %36 : vector<1x8x128xf32> to vector<8x128xf32>
    %38 = vector.shape_cast %35 : vector<8x128xf32> to vector<1x8x128xf32>
    tpu.vector_store %arg8[%c2_27, %c0_28, %c0_29], %38 {strides = array<i32>} : memref<3x8x128xf32, #tpu.memory_space<vmem>>, vector<1x8x128xf32>,
    %c0_i32_30 = arith.constant 0 : i32
    %39 = arith.cmpi eq, %arg0, %c0_i32_30 : i32
    %40 = arith.extui %39 : i1 to i32
    %c0_i32_31 = arith.constant 0 : i32
    %41 = arith.cmpi ne, %40, %c0_i32_31 : i32
    scf.if %41 {
      %c0_32 = arith.constant 0 : index
      %c0_33 = arith.constant 0 : index
      %c0_34 = arith.constant 0 : index
      %42 = vector.load %arg8[%c0_32, %c0_33, %c0_34] : memref<3x8x128xf32, #tpu.memory_space<vmem>>, vector<1x8x128xf32>
      %43 = vector.shape_cast %42 : vector<1x8x128xf32> to vector<8x128xf32>
      %44 = vector.shape_cast %43 : vector<8x128xf32> to vector<1x8x128xf32>
      %cst_35 = arith.constant dense<0.000000e+00> : vector<1xf32>
      %45 = vector.multi_reduction <add>, %44, %cst_35 [1, 2] : vector<1x8x128xf32> to vector<1xf32>
      %46 = vector.shape_cast %45 : vector<1xf32> to vector<1x1x1xf32>
      %47 = vector.extract %46[0, 0, 0] : f32 from vector<1x1x1xf32>
      %c0_36 = arith.constant 0 : index
      %48 = memref.load %arg7[%c0_36] : memref<3xf32, #tpu.memory_space<smem>>
      memref.store %47, %arg7[%c0_36] : memref<3xf32, #tpu.memory_space<smem>>
      %c1_37 = arith.constant 1 : index
      %c0_38 = arith.constant 0 : index
      %c0_39 = arith.constant 0 : index
      %49 = vector.load %arg8[%c1_37, %c0_38, %c0_39] : memref<3x8x128xf32, #tpu.memory_space<vmem>>, vector<1x8x128xf32>
      %50 = vector.shape_cast %49 : vector<1x8x128xf32> to vector<8x128xf32>
      %51 = vector.shape_cast %50 : vector<8x128xf32> to vector<1x8x128xf32>
      %cst_40 = arith.constant dense<0.000000e+00> : vector<1xf32>
      %52 = vector.multi_reduction <add>, %51, %cst_40 [1, 2] : vector<1x8x128xf32> to vector<1xf32>
      %53 = vector.shape_cast %52 : vector<1xf32> to vector<1x1x1xf32>
      %54 = vector.extract %53[0, 0, 0] : f32 from vector<1x1x1xf32>
      %c1_41 = arith.constant 1 : index
      %55 = memref.load %arg7[%c1_41] : memref<3xf32, #tpu.memory_space<smem>>
      memref.store %54, %arg7[%c1_41] : memref<3xf32, #tpu.memory_space<smem>>
      %c2_42 = arith.constant 2 : index
      %c0_43 = arith.constant 0 : index
      %c0_44 = arith.constant 0 : index
      %56 = vector.load %arg8[%c2_42, %c0_43, %c0_44] : memref<3x8x128xf32, #tpu.memory_space<vmem>>, vector<1x8x128xf32>
      %57 = vector.shape_cast %56 : vector<1x8x128xf32> to vector<8x128xf32>
      %58 = vector.shape_cast %57 : vector<8x128xf32> to vector<1x8x128xf32>
      %cst_45 = arith.constant dense<0.000000e+00> : vector<1xf32>
      %59 = vector.multi_reduction <add>, %58, %cst_45 [1, 2] : vector<1x8x128xf32> to vector<1xf32>
      %60 = vector.shape_cast %59 : vector<1xf32> to vector<1x1x1xf32>
      %61 = vector.extract %60[0, 0, 0] : f32 from vector<1x1x1xf32>
      %c2_46 = arith.constant 2 : index
      %62 = memref.load %arg7[%c2_46] : memref<3xf32, #tpu.memory_space<smem>>
      memref.store %61, %arg7[%c2_46] : memref<3xf32, #tpu.memory_space<smem>>
    } else {
    }
    return
  }
  func.func @transform_0(%arg0: i32) -> (i32, i32) {
    %c0_i32 = arith.constant 0 : i32
    %c0_i32_0 = arith.constant 0 : i32
    return %arg0, %c0_i32 : i32, i32
  }
  func.func @transform_1(%arg0: i32) -> (i32, i32) {
    %c0_i32 = arith.constant 0 : i32
    %c0_i32_0 = arith.constant 0 : i32
    return %arg0, %c0_i32 : i32, i32
  }
  func.func @transform_2(%arg0: i32) -> (i32, i32) {
    %c0_i32 = arith.constant 0 : i32
    %c0_i32_0 = arith.constant 0 : i32
    return %arg0, %c0_i32 : i32, i32
  }
  func.func @transform_3(%arg0: i32) -> (i32, i32) {
    %c0_i32 = arith.constant 0 : i32
    %c0_i32_0 = arith.constant 0 : i32
    return %arg0, %c0_i32 : i32, i32
  }
  func.func @transform_4(%arg0: i32) -> (i32, i32) {
    %c0_i32 = arith.constant 0 : i32
    %c0_i32_0 = arith.constant 0 : i32
    return %arg0, %c0_i32 : i32, i32
  }
  func.func @transform_5(%arg0: i32) -> (i32, i32) {
    %c0_i32 = arith.constant 0 : i32
    %c0_i32_0 = arith.constant 0 : i32
    return %arg0, %c0_i32 : i32, i32
  }
  func.func @transform_6(%arg0: i32) -> i32 {
    %c0_i32 = arith.constant 0 : i32
    %c0_i32_0 = arith.constant 0 : i32
    return %c0_i32 : i32
  }
}

</mosaic_0001>

<llo_original>
// kernel: multimodal_loss.1
$region0: #{multimodal_loss.1}
  #allocation0 [shape = 'u32[]', space=smem, size = 0x4, offset = 0x4, fixed_abs, tag = 'smem constant byte address 0x4 - core index']
  #allocation1 [shape = 'u32[144,128]{1,0:T(1,128)}', space=vmem, size = 0x12000, scoped, tag = 'internal scratch']
  #allocation2 [shape = 'f32[3,8,128]{2,1,0:T(8,128)}', space=vmem, size = 0x3000, scoped, tag = 'scratch operand']
  %s0 = inlined_call_operand.vmem [shape: f32[32,128], index: 0, kind: input, shape index: {}]
  %s1 = inlined_call_operand.vmem [shape: f32[32,128], index: 1, kind: input, shape index: {}]
  %s2 = inlined_call_operand.vmem [shape: f32[32,128], index: 2, kind: input, shape index: {}]
  %s3 = inlined_call_operand.vmem [shape: f32[32,128], index: 3, kind: input, shape index: {}]
  %s4 = inlined_call_operand.vmem [shape: f32[32,128], index: 4, kind: input, shape index: {}]
  %s5 = inlined_call_operand.vmem [shape: f32[32,128], index: 5, kind: input, shape index: {}]
  %s6 = inlined_call_operand.vmem [shape: f32[3], index: 6, kind: output, shape index: {}]
  %s7 = sld [smem:[#allocation0]]
  $region42: #{multimodal_loss.1} parent=0
    _
  %s9 = ssub.s32 1, %s7
  %s10 = scalar_select 0, %s9, %s7
  $region1: #{multimodal_loss.1} parent=0
    #allocation3 [shape = 'u8[512]{0}', space=smem, size = 0x200, scoped, tag = 'output window, operand 0, single buffered']
    #allocation4 [shape = 's32[1]{0}', space=sflag, size = 0x4, scoped, tag = 'scoped memory for multimodal_loss.1']
    %11 = vsyncpa [#allocation4], 0
    // Predicated region
    $region2: #{multimodal_loss.1} parent=1 // pred_check
      _
    $region3: #{multimodal_loss.1} parent=1 // pred_check_branch
      %13 = sbr.rel (0) target = $region5
    $region4: #{multimodal_loss.1} parent=1 // pred_region
      _
    $region5: #{multimodal_loss.1} parent=1 // pred_fallthru
      _
    // Predicated region
    $region6: #{multimodal_loss.1} parent=1 // pred_check
      _
    $region7: #{multimodal_loss.1} parent=1 // pred_check_branch
      %15 = sbr.rel (0) target = $region9
    $region8: #{multimodal_loss.1} parent=1 // pred_region
      _
    $region9: #{multimodal_loss.1} parent=1 // pred_fallthru
      _
    // Predicated region
    $region10: #{multimodal_loss.1} parent=1 // pred_check
      _
    $region11: #{multimodal_loss.1} parent=1 // pred_check_branch
      %17 = sbr.rel (0) target = $region13
    $region12: #{multimodal_loss.1} parent=1 // pred_region
      _
    $region13: #{multimodal_loss.1} parent=1 // pred_fallthru
      _
    // Predicated region
    $region14: #{multimodal_loss.1} parent=1 // pred_check
      _
    $region15: #{multimodal_loss.1} parent=1 // pred_check_branch
      %19 = sbr.rel (0) target = $region17
    $region16: #{multimodal_loss.1} parent=1 // pred_region
      _
    $region17: #{multimodal_loss.1} parent=1 // pred_fallthru
      _
    // Predicated region
    $region18: #{multimodal_loss.1} parent=1 // pred_check
      _
    $region19: #{multimodal_loss.1} parent=1 // pred_check_branch
      %21 = sbr.rel (0) target = $region21
    $region20: #{multimodal_loss.1} parent=1 // pred_region
      _
    $region21: #{multimodal_loss.1} parent=1 // pred_fallthru
      _
    // Predicated region
    $region22: #{multimodal_loss.1} parent=1 // pred_check
      _
    $region23: #{multimodal_loss.1} parent=1 // pred_check_branch
      %23 = sbr.rel (0) target = $region25
    $region24: #{multimodal_loss.1} parent=1 // pred_region
      _
    $region25: #{multimodal_loss.1} parent=1 // pred_fallthru
      _
    %p24 = scmp.eq.s32.totalorder 0, 0
    // Predicated region
    $region26: #{multimodal_loss.1} parent=1 // pred_check
      %p25 = pneg %p24
    $region27: #{multimodal_loss.1} parent=1 // pred_check_branch
      %27 = sbr.rel (%p25) target = $region29
    $region28: #{multimodal_loss.1} parent=1 // pred_region
      %28 = vst [vmem:[#allocation2] sm:$0xff] 0.0
      %29 = vst [vmem:[#allocation2 + $0x8] sm:$0xff] 0.0
      %30 = vst [vmem:[#allocation2 + $0x10] sm:$0xff] 0.0
    $region29: #{multimodal_loss.1} parent=1 // pred_fallthru
      _
    %v31 = vld [vmem:[#allocation2] sm:$0xff]
    %v32 = vld [vmem:[%s0] sm:$0xff]
    %v33 = vld [vmem:[%s0 + $0x8] sm:$0xff]
    %v34 = vld [vmem:[%s0 + $0x10] sm:$0xff]
    %v35 = vld [vmem:[%s0 + $0x18] sm:$0xff]
    %v36 = vld [vmem:[%s1] sm:$0xff]
    %v37 = vld [vmem:[%s1 + $0x8] sm:$0xff]
    %v38 = vld [vmem:[%s1 + $0x10] sm:$0xff]
    %v39 = vld [vmem:[%s1 + $0x18] sm:$0xff]
    %v40 = vsub.f32 %v32, %v36
    %v41 = vsub.f32 %v33, %v37
    %v42 = vsub.f32 %v34, %v38
    %v43 = vsub.f32 %v35, %v39
    %v44 = vand.u32 2147483647, %v40
    %v45 = vand.u32 2147483647, %v41
    %v46 = vand.u32 2147483647, %v42
    %v47 = vand.u32 2147483647, %v43
    %v48 = vadd.f32 %v44, %v45
    %v49 = vadd.f32 %v48, %v46
    %v50 = vadd.f32 %v49, %v47
    %v51 = vadd.f32 %v31, %v50
    %52 = vst [vmem:[#allocation2] sm:$0xff] %v51
    %s53 = scalar_lea.vmem [#allocation2], 8
    %v54 = vld [vmem:[%s53] sm:$0xff]
    %v55 = vld [vmem:[%s2] sm:$0xff]
    %v56 = vld [vmem:[%s2 + $0x8] sm:$0xff]
    %v57 = vld [vmem:[%s2 + $0x10] sm:$0xff]
    %v58 = vld [vmem:[%s2 + $0x18] sm:$0xff]
    %v59 = vld [vmem:[%s3] sm:$0xff]
    %v60 = vld [vmem:[%s3 + $0x8] sm:$0xff]
    %v61 = vld [vmem:[%s3 + $0x10] sm:$0xff]
    %v62 = vld [vmem:[%s3 + $0x18] sm:$0xff]
    %v63 = vsub.f32 %v55, %v59
    %v64 = vsub.f32 %v56, %v60
    %v65 = vsub.f32 %v57, %v61
    %v66 = vsub.f32 %v58, %v62
    %v67 = vand.u32 2147483647, %v63
    %v68 = vand.u32 2147483647, %v64
    %v69 = vand.u32 2147483647, %v65
    %v70 = vand.u32 2147483647, %v66
    %v71 = vadd.f32 %v67, %v68
    %v72 = vadd.f32 %v71, %v69
    %v73 = vadd.f32 %v72, %v70
    %v74 = vadd.f32 %v54, %v73
    %75 = vst [vmem:[%s53] sm:$0xff] %v74
    %s76 = scalar_lea.vmem [#allocation2], 16
    %v77 = vld [vmem:[%s76] sm:$0xff]
    %v78 = vld [vmem:[%s4] sm:$0xff]
    %v79 = vld [vmem:[%s4 + $0x8] sm:$0xff]
    %v80 = vld [vmem:[%s4 + $0x10] sm:$0xff]
    %v81 = vld [vmem:[%s4 + $0x18] sm:$0xff]
    %v82 = vld [vmem:[%s5] sm:$0xff]
    %v83 = vld [vmem:[%s5 + $0x8] sm:$0xff]
    %v84 = vld [vmem:[%s5 + $0x10] sm:$0xff]
    %v85 = vld [vmem:[%s5 + $0x18] sm:$0xff]
    %v86 = vsub.f32 %v78, %v82
    %v87 = vsub.f32 %v79, %v83
    %v88 = vsub.f32 %v80, %v84
    %v89 = vsub.f32 %v81, %v85
    %v90 = vand.u32 2147483647, %v86
    %v91 = vand.u32 2147483647, %v87
    %v92 = vand.u32 2147483647, %v88
    %v93 = vand.u32 2147483647, %v89
    %v94 = vadd.f32 %v90, %v91
    %v95 = vadd.f32 %v94, %v92
    %v96 = vadd.f32 %v95, %v93
    %v97 = vadd.f32 %v77, %v96
    %98 = vst [vmem:[%s76] sm:$0xff] %v97
    // Predicated region
    $region30: #{multimodal_loss.1} parent=1 // pred_check
      %p99 = pneg %p24
    $region31: #{multimodal_loss.1} parent=1 // pred_check_branch
      %101 = sbr.rel (%p99) target = $region33
    $region32: #{multimodal_loss.1} parent=1 // pred_region
      %v102 = vld [vmem:[#allocation2] sm:$0xff]
      %103 = vadd.xlane.f32.xlu0 %v102
      %v104 = vpop.xlane.xlu0 %103
      %v105 = vrot.slane %v104, 4
      %v106 = vadd.f32 %v104, %v105
      %v107 = vrot.slane %v106, 2
      %v108 = vadd.f32 %v106, %v107
      %v109 = vrot.slane %v108, 1
      %v110 = vadd.f32 %v108, %v109
      %s111 = vtos %v110
      %s112 = scalar_lea.smem [#allocation3], 0
      %113 = sst [smem:[%s112]] %s111
      %v114 = vld [vmem:[%s53] sm:$0xff]
      %115 = vadd.xlane.f32.xlu0 %v114
      %v116 = vpop.xlane.xlu0 %115
      %v117 = vrot.slane %v116, 4
      %v118 = vadd.f32 %v116, %v117
      %v119 = vrot.slane %v118, 2
      %v120 = vadd.f32 %v118, %v119
      %v121 = vrot.slane %v120, 1
      %v122 = vadd.f32 %v120, %v121
      %s123 = vtos %v122
      %s124 = scalar_lea.smem [#allocation3], 1
      %125 = sst [smem:[%s124]] %s123
      %v126 = vld [vmem:[%s76] sm:$0xff]
      %127 = vadd.xlane.f32.xlu0 %v126
      %v128 = vpop.xlane.xlu0 %127
      %v129 = vrot.slane %v128, 4
      %v130 = vadd.f32 %v128, %v129
      %v131 = vrot.slane %v130, 2
      %v132 = vadd.f32 %v130, %v131
      %v133 = vrot.slane %v132, 1
      %v134 = vadd.f32 %v132, %v133
      %s135 = vtos %v134
      %s136 = scalar_lea.smem [#allocation3], 2
      %137 = sst [smem:[%s136]] %s135
    $region33: #{multimodal_loss.1} parent=1 // pred_fallthru
      _
    // Predicated region
    $region34: #{multimodal_loss.1} parent=1 // pred_check
      _
    $region35: #{multimodal_loss.1} parent=1 // pred_check_branch
      %139 = sbr.rel (0) target = $region37
    $region36: #{multimodal_loss.1} parent=1 // pred_region
      %s141 = ssub.s32 16, 16
      %142 = vsyncadd [#allocation4], %s141
      %s144 = sshll.u32 %s6, 4
      %s145 = int_to_ptr.vmem [resolvable:$true] %s144
      %147 = dma.smem_to_vmem [#allocation3], 16, %s145, [#allocation4]
    $region37: #{multimodal_loss.1} parent=1 // pred_fallthru
      _
    // Predicated region
    $region38: #{multimodal_loss.1} parent=1 // pred_check
      _
    $region39: #{multimodal_loss.1} parent=1 // pred_check_branch
      %149 = sbr.rel (0) target = $region41
    $region40: #{multimodal_loss.1} parent=1 // pred_region
      %150 = dma.done [#allocation4], 16
    $region41: #{multimodal_loss.1} parent=1 // pred_fallthru
      _
    %151 = sfence
    %152 = vsyncpa [#allocation4], 1

</llo_original>
